<compile_context>
chip_gen: v7x
topology: tpu7x:2x2x1
jax: 0.10.0
libtpu: 0.0.40
codegen_flags: <defaults>
</compile_context>

<pallas_src>
import functools

import jax
import jax.numpy as jnp
from jax import lax
from jax.experimental import pallas as pl
from jax.experimental.pallas import tpu as pltpu


def _round_up(x, m):
    return ((x + m - 1) // m) * m


# ---------------------------------------------------------------------------
# Kernels
# ---------------------------------------------------------------------------
def _proj_kernel(x_ref, w_ref, o_ref):
    """o_tile = x_tile @ Wcat  (bf16 operands, f32 accumulate, bf16 store)."""
    o_ref[...] = jnp.dot(x_ref[...], w_ref[...],
                         preferred_element_type=jnp.float32).astype(o_ref.dtype)


def _cheb_mid_kernel(lhat_ref, xw0_ref, xw1_ref, b1_ref, w2_ref, hw_ref):
    """h_tile  = relu(xw0_tile + Lhat_strip @ xw1_full + b1)   (layer-1 aggregate)
       hw_tile = h_tile @ W2cat                                 (layer-2 packed proj)"""
    t = jnp.dot(lhat_ref[...], xw1_ref[...], preferred_element_type=jnp.float32)
    h = jnp.maximum(t + xw0_ref[...].astype(jnp.float32) + b1_ref[...], 0.0)
    # F.dropout(..., training=self.training): eval mode -> identity.
    # TODO(synk): training-mode dropout mask not implemented (inference semantics).
    hw_ref[...] = jnp.dot(h.astype(jnp.bfloat16), w2_ref[...],
                          preferred_element_type=jnp.float32).astype(hw_ref.dtype)


def _cheb_out_kernel(lhat_ref, hw0_ref, hw1_ref, b2_ref, o_ref, *, ncls):
    """z_tile = hw0_tile + Lhat_strip @ hw1_full + b2;
       out    = log_softmax over the first `ncls` (valid) lanes."""
    t = jnp.dot(lhat_ref[...], hw1_ref[...], preferred_element_type=jnp.float32)
    z = t + hw0_ref[...].astype(jnp.float32) + b2_ref[...]
    col = lax.broadcasted_iota(jnp.int32, z.shape, 1)
    z = jnp.where(col < ncls, z, -1e30)           # mask padded class lanes
    m = jnp.max(z, axis=1, keepdims=True)
    s = z - m
    lse = jnp.log(jnp.sum(jnp.exp(s), axis=1, keepdims=True))
    o_ref[...] = (s - lse).astype(o_ref.dtype)


# ---------------------------------------------------------------------------
# Wrapper
# ---------------------------------------------------------------------------
def chebnet_forward(x, lhat, params, *, tile_n=None, vmem_budget=40 << 20):
    n, f = x.shape
    hid = params["w1_0"].shape[1]
    ncls = params["w2_0"].shape[1]
    hpad = _round_up(max(hid, 128), 128)
    cpad = _round_up(max(ncls, 128), 128)
    f32, bf16 = jnp.float32, jnp.bfloat16

    # --- row-tile size: >= min(N, 512), multiple of 8, fits ~40 MiB VMEM (v7x) ---
    def working_set(tn):
        npd_ = _round_up(n, tn)
        return (2 * tn * npd_ * 2                      # double-buffered Lhat strip (bf16)
                + 2 * npd_ * max(hpad, cpad) * 2       # resident "full" packed half (bf16)
                + 4 * tn * 2 * max(hpad, cpad) * 4)    # row-tile ins/outs + f32 temps

    if tile_n is None:
        tile_n = min(_round_up(n, 8), 512)
        while tile_n > 8 and working_set(tile_n) > vmem_budget:
            tile_n = max(8, _round_up(tile_n // 2, 8))
    npd = _round_up(n, tile_n)
    nt = npd // tile_n
    need = working_set(tile_n)
    mosaic_params = pltpu.CompilerParams(
        dimension_semantics=("parallel",),
        vmem_limit_bytes=int(max(32 << 20, min(need + (8 << 20), 64 << 20))))

    # --- host-side packing / zero-padding (lane-dense) ---
    lhat_p = jnp.zeros((npd, npd), bf16).at[:n, :n].set(lhat.astype(bf16))
    x_p = jnp.zeros((npd, f), bf16).at[:n, :].set(x.astype(bf16))
    w1cat = jnp.zeros((f, 2 * hpad), f32)
    w1cat = (w1cat.at[:, :hid].set(params["w1_0"])
                  .at[:, hpad:hpad + hid].set(params["w1_1"])).astype(bf16)
    b1p = jnp.zeros((1, hpad), f32).at[0, :hid].set(params["b1"])
    w2cat = jnp.zeros((hpad, 2 * cpad), f32)
    w2cat = (w2cat.at[:hid, :ncls].set(params["w2_0"])
                  .at[:hid, cpad:cpad + ncls].set(params["w2_1"])).astype(bf16)
    b2p = jnp.zeros((1, cpad), f32).at[0, :ncls].set(params["b2"])

    row = lambda w: pl.BlockSpec((tile_n, w), lambda i: (i, 0))
    full = lambda shp: pl.BlockSpec(shp, lambda i: (0, 0))
    lhat_spec = pl.BlockSpec((tile_n, npd), lambda i: (i, 0))

    # --- kernel A: packed layer-1 projection  xw1cat = x @ [W1_0 | W1_1] ---
    xw1cat = pl.pallas_call(
        _proj_kernel,
        grid=(nt,),
        in_specs=[row(f), full((f, 2 * hpad))],
        out_specs=row(2 * hpad),
        out_shape=jax.ShapeDtypeStruct((npd, 2 * hpad), bf16),
        compiler_params=mosaic_params,
        cost_estimate=pl.CostEstimate(
            flops=2 * npd * f * 2 * hpad, transcendentals=0,
            bytes_accessed=npd * f * 2 + f * 2 * hpad * 2 + npd * 2 * hpad * 2),
    )(x_p, w1cat)

    # --- kernel B: layer-1 aggregate + ReLU + packed layer-2 projection ---
    hw2cat = pl.pallas_call(
        _cheb_mid_kernel,
        grid=(nt,),
        in_specs=[
            lhat_spec,                                        # Lhat strip (tile_n, N)
            pl.BlockSpec((tile_n, hpad), lambda i: (i, 0)),   # xw0 row tile  (cols [0:H])
            pl.BlockSpec((npd, hpad), lambda i: (0, 1)),      # xw1 full      (cols [H:2H])
            full((1, hpad)),                                  # b1
            full((hpad, 2 * cpad)),                           # W2cat
        ],
        out_specs=row(2 * cpad),
        out_shape=jax.ShapeDtypeStruct((npd, 2 * cpad), bf16),
        compiler_params=mosaic_params,
        cost_estimate=pl.CostEstimate(
            flops=2 * npd * npd * hpad + 2 * npd * hpad * 2 * cpad, transcendentals=0,
            bytes_accessed=(npd * npd * 2 + npd * 2 * hpad * 2
                            + hpad * 2 * cpad * 2 + npd * 2 * cpad * 2)),
    )(lhat_p, xw1cat, xw1cat, b1p, w2cat)

    # --- kernel C: layer-2 aggregate + masked log_softmax (lane-dense output slab) ---
    outp = pl.pallas_call(
        functools.partial(_cheb_out_kernel, ncls=ncls),
        grid=(nt,),
        in_specs=[
            lhat_spec,
            pl.BlockSpec((tile_n, cpad), lambda i: (i, 0)),   # hw0 row tile
            pl.BlockSpec((npd, cpad), lambda i: (0, 1)),      # hw1 full
            full((1, cpad)),                                  # b2
        ],
        out_specs=row(cpad),
        out_shape=jax.ShapeDtypeStruct((npd, cpad), jnp.float32),
        compiler_params=mosaic_params,
        cost_estimate=pl.CostEstimate(
            flops=2 * npd * npd * cpad,
            transcendentals=npd * cpad + npd,
            bytes_accessed=npd * npd * 2 + npd * 2 * cpad * 2 + npd * cpad * 4),
    )(lhat_p, hw2cat, hw2cat, b2p)

    return outp[:n, :ncls]


# ---------------------------------------------------------------------------
# Graph / parameter setup (glue, plain JAX)
# ---------------------------------------------------------------------------
def build_scaled_laplacian(adj):
    """Lhat = -D^{-1/2} A D^{-1/2} (ChebConv sym norm, lambda_max=2.0)."""
    deg = jnp.sum(adj, axis=1)
    dinv_sqrt = jnp.where(deg > 0, 1.0 / jnp.sqrt(jnp.maximum(deg, 1e-12)), 0.0)
    return -(dinv_sqrt[:, None] * adj * dinv_sqrt[None, :])


def glorot(key, shape):
    fan_in, fan_out = shape
    lim = jnp.sqrt(6.0 / (fan_in + fan_out))
    return jax.random.uniform(key, shape, jnp.float32, -lim, lim)


if __name__ == "__main__":
    N, F_IN, HID, N_CLS = 128, 32, 16, 8  # small synthetic Planetoid-like graph

    key = jax.random.PRNGKey(0)
    k_adj, k_x, k_w10, k_w11, k_w20, k_w21 = jax.random.split(key, 6)

    # Symmetric random adjacency, no self loops.
    a = (jax.random.uniform(k_adj, (N, N)) < 0.05).astype(jnp.float32)
    adj = jnp.maximum(a, a.T) * (1.0 - jnp.eye(N, dtype=jnp.float32))
    lhat = build_scaled_laplacian(adj)

    # Row-normalized node features (mimics T.NormalizeFeatures()).
    x = jax.random.uniform(k_x, (N, F_IN), jnp.float32)
    x = x / jnp.maximum(jnp.sum(x, axis=1, keepdims=True), 1e-12)

    params = {
        "w1_0": glorot(k_w10, (F_IN, HID)),
        "w1_1": glorot(k_w11, (F_IN, HID)),
        "b1": jnp.zeros((HID,), jnp.float32),
        "w2_0": glorot(k_w20, (HID, N_CLS)),
        "w2_1": glorot(k_w21, (HID, N_CLS)),
        "b2": jnp.zeros((N_CLS,), jnp.float32),
    }

    out = jax.block_until_ready(chebnet_forward(x, lhat, params))
    assert out.shape == (N, N_CLS)

    # --- check: original PyTorch/PyG semantics in full f32 (loose tol: bf16 operands) ---
    def ref_cheb(l, xx, w0, w1, b):
        return xx @ w0 + (l @ xx) @ w1 + b

    h_ref = jnp.maximum(
        ref_cheb(lhat, x, params["w1_0"], params["w1_1"], params["b1"]), 0.0)
    z_ref = ref_cheb(lhat, h_ref, params["w2_0"], params["w2_1"], params["b2"])
    ref = jax.nn.log_softmax(z_ref, axis=1)
    err = jnp.max(jnp.abs(out - ref))
    assert err < 5e-2, f"max abs err vs f32 reference: {err}"

    # Structural sanity: each output row is a valid log-probability vector.
    assert jnp.max(jnp.abs(jnp.sum(jnp.exp(out), axis=1) - 1.0)) < 1e-3

    print("KERNEL_OK")
</pallas_src>

<mosaic_0001>
module attributes {stable_mosaic.version = 11 : i64} {
  func.func @_proj_kernel(%arg0: i32, %arg1: memref<128x32xbf16, #tpu.memory_space<vmem>>, %arg2: memref<32x256xbf16, #tpu.memory_space<vmem>>, %arg3: memref<128x256xbf16, #tpu.memory_space<vmem>>) attributes {dimension_semantics = [#tpu.dimension_semantics<parallel>], iteration_bounds = array<i64: 1>, scalar_prefetch = 0 : i64, scratch_operands = 0 : i64, tpu.core_type = #tpu.core_type<tc>, window_params = [{transform_indices = @transform_0, window_bounds = array<i64: 128, 32>}, {pipeline_mode = #tpu.pipeline_mode<synchronous>, transform_indices = @transform_1, window_bounds = array<i64: 32, 256>}, {transform_indices = @transform_2, window_bounds = array<i64: 128, 256>}]} {
    %c0 = arith.constant 0 : index
    %c0_0 = arith.constant 0 : index
    %0 = vector.load %arg1[%c0, %c0_0] : memref<128x32xbf16, #tpu.memory_space<vmem>>, vector<128x32xbf16>
    %c0_1 = arith.constant 0 : index
    %c0_2 = arith.constant 0 : index
    %1 = vector.load %arg2[%c0_1, %c0_2] : memref<32x256xbf16, #tpu.memory_space<vmem>>, vector<32x256xbf16>
    %cst = arith.constant dense<0.000000e+00> : vector<128x256xf32>
    %2 = tpu.matmul %0, %1, %cst {dimension_numbers = #tpu.dot_dimension_numbers<[1], [0], [0], [1], [0, 0, 1, 1], [], []>} : vector<128x32xbf16>, vector<32x256xbf16>, vector<128x256xf32> -> vector<128x256xf32>
    %3 = arith.truncf %2 : vector<128x256xf32> to vector<128x256xbf16>
    %c0_3 = arith.constant 0 : index
    %c0_4 = arith.constant 0 : index
    %4 = vector.load %arg3[%c0_3, %c0_4] : memref<128x256xbf16, #tpu.memory_space<vmem>>, vector<128x256xbf16>
    tpu.vector_store %arg3[%c0_3, %c0_4], %3 {strides = array<i32>} : memref<128x256xbf16, #tpu.memory_space<vmem>>, vector<128x256xbf16>,
    return
  }
  func.func @transform_0(%arg0: i32) -> (i32, i32) {
    %c0_i32 = arith.constant 0 : i32
    %c0_i32_0 = arith.constant 0 : i32
    return %arg0, %c0_i32 : i32, i32
  }
  func.func @transform_1(%arg0: i32) -> (i32, i32) {
    %c0_i32 = arith.constant 0 : i32
    %c0_i32_0 = arith.constant 0 : i32
    %c0_i32_1 = arith.constant 0 : i32
    return %c0_i32, %c0_i32_0 : i32, i32
  }
  func.func @transform_2(%arg0: i32) -> (i32, i32) {
    %c0_i32 = arith.constant 0 : i32
    %c0_i32_0 = arith.constant 0 : i32
    return %arg0, %c0_i32 : i32, i32
  }
}

</mosaic_0001>

<llo_original>
// kernel: tpu_custom_call.1
$region0: #{tpu_custom_call.1}
  #allocation0 [shape = 'u32[]', space=smem, size = 0x4, offset = 0x4, fixed_abs, tag = 'smem constant byte address 0x4 - core index']
  #allocation1 [shape = 'u32[144,128]{1,0:T(1,128)}', space=vmem, size = 0x12000, scoped, tag = 'internal scratch']
  %s0 = inlined_call_operand.vmem [shape: bf16[128,32], index: 0, kind: input, shape index: {}]
  %s1 = inlined_call_operand.vmem [shape: bf16[32,256], index: 1, kind: input, shape index: {}]
  %s2 = inlined_call_operand.hbm [shape: bf16[128,256], index: 2, kind: output, shape index: {}]
  %s3 = sld [smem:[#allocation0]]
  $region18: #{tpu_custom_call.1} parent=0
    _
  %s5 = ssub.s32 1, %s3
  %s6 = scalar_select 0, %s5, %s3
  $region1: #{tpu_custom_call.1} parent=0
    #allocation2 [shape = 'u8[65536]{0}', space=vmem, size = 0x10000, scoped, tag = 'output window, operand 0, single buffered']
    #allocation3 [shape = 's32[1]{0}', space=sflag, size = 0x4, scoped, tag = 'scoped memory for tpu_custom_call.1']
    %7 = vsyncpa [#allocation3], 0
    // Predicated region
    $region2: #{tpu_custom_call.1} parent=1 // pred_check
      _
    $region3: #{tpu_custom_call.1} parent=1 // pred_check_branch
      %9 = sbr.rel (0) target = $region5
    $region4: #{tpu_custom_call.1} parent=1 // pred_region
      _
    $region5: #{tpu_custom_call.1} parent=1 // pred_fallthru
      _
    // Predicated region
    $region6: #{tpu_custom_call.1} parent=1 // pred_check
      _
    $region7: #{tpu_custom_call.1} parent=1 // pred_check_branch
      %11 = sbr.rel (0) target = $region9
    $region8: #{tpu_custom_call.1} parent=1 // pred_region
      _
    $region9: #{tpu_custom_call.1} parent=1 // pred_fallthru
      _
    %v13 = vld [vmem:[%s0] sm:$0xf]
    %v14 = vld [vmem:[%s0 + $0x4] sm:$0xf]
    %v15 = vld [vmem:[%s0 + $0x8] sm:$0xf]
    %v16 = vld [vmem:[%s0 + $0xc] sm:$0xf]
    %v17 = vld [vmem:[%s0 + $0x10] sm:$0xf]
    %v18 = vld [vmem:[%s0 + $0x14] sm:$0xf]
    %v19 = vld [vmem:[%s0 + $0x18] sm:$0xf]
    %v20 = vld [vmem:[%s0 + $0x1c] sm:$0xf]
    %v21 = vld [vmem:[%s0 + $0x20] sm:$0xf]
    %v22 = vld [vmem:[%s0 + $0x24] sm:$0xf]
    %v23 = vld [vmem:[%s0 + $0x28] sm:$0xf]
    %v24 = vld [vmem:[%s0 + $0x2c] sm:$0xf]
    %v25 = vld [vmem:[%s0 + $0x30] sm:$0xf]
    %v26 = vld [vmem:[%s0 + $0x34] sm:$0xf]
    %v27 = vld [vmem:[%s0 + $0x38] sm:$0xf]
    %v28 = vld [vmem:[%s0 + $0x3c] sm:$0xf]
    %v29 = vld [vmem:[%s1] sm:$0xff]
    %v30 = vld [vmem:[%s1 + $0x8] sm:$0xff]
    %v31 = vld [vmem:[%s1 + $0x10] sm:$0xff]
    %v32 = vld [vmem:[%s1 + $0x18] sm:$0xff]
    %v49 = vunpack.c.l.b16 %v13
    %v50 = vunpack.c.l.b16 %v14
    %v51 = vunpack.c.l.b16 %v15
    %v52 = vunpack.c.l.b16 %v16
    %v53 = vunpack.c.l.b16 %v17
    %v54 = vunpack.c.l.b16 %v18
    %v55 = vunpack.c.l.b16 %v19
    %v56 = vunpack.c.l.b16 %v20
    %v57 = vunpack.c.l.b16 %v21
    %v58 = vunpack.c.l.b16 %v22
    %v59 = vunpack.c.l.b16 %v23
    %v60 = vunpack.c.l.b16 %v24
    %v61 = vunpack.c.l.b16 %v25
    %v62 = vunpack.c.l.b16 %v26
    %v63 = vunpack.c.l.b16 %v27
    %v64 = vunpack.c.l.b16 %v28
    %v65 = vpack.c.b16 %v50, %v49
    %v66 = vpack.c.b16 %v52, %v51
    %v67 = vpack.c.b16 %v54, %v53
    %v68 = vpack.c.b16 %v56, %v55
    %v69 = vpack.c.b16 %v58, %v57
    %v70 = vpack.c.b16 %v60, %v59
    %v71 = vpack.c.b16 %v62, %v61
    %v72 = vpack.c.b16 %v64, %v63
    %v77 = vunpack.c.l.b16 %v29
    %v78 = vunpack.c.h.b16 %v29
    %v79 = vunpack.c.l.b16 %v30
    %v80 = vunpack.c.h.b16 %v30
    %v81 = vunpack.c.l.b16 %v31
    %v82 = vunpack.c.h.b16 %v31
    %v83 = vunpack.c.l.b16 %v32
    %v84 = vunpack.c.h.b16 %v32
    %v85 = vpack.c.b16 %v79, %v77
    %v86 = vpack.c.b16 %v80, %v78
    %v87 = vpack.c.b16 %v83, %v81
    %v88 = vpack.c.b16 %v84, %v82
    %vm93 = vcmask 261120
    %v95 = vsel %vm93, %v65, 0
    %v98 = vsel %vm93, %v66, 0
    %v101 = vsel %vm93, %v67, 0
    %v104 = vsel %vm93, %v68, 0
    %v107 = vsel %vm93, %v69, 0
    %v110 = vsel %vm93, %v70, 0
    %v113 = vsel %vm93, %v71, 0
    %v116 = vsel %vm93, %v72, 0
    %118 = vmatprep.subr.bf16.mxu0 %v86
    %119 = vmatpush1.bf16.msra.mxu0 %v85
    %120 = vmatprep.subr.bf16.mxu0 %v88
    %121 = vmatpush1.bf16.msra.mxu0 %v87
    %122 = vmatprep.subr.bf16.mxu0 0
    %123 = vmatpush1.bf16.msra.mxu0 0
    %124 = vmatprep.subr.bf16.mxu0 0
    %125 = vmatpush1.bf16.msra.mxu0 0
    %126 = vmatprep.subr.bf16.mxu0 0
    %127 = vmatpush1.bf16.msra.mxu0 0
    %128 = vmatprep.subr.bf16.mxu0 0
    %129 = vmatpush1.bf16.msra.mxu0 0
    %130 = vmatprep.subr.bf16.mxu0 0
    %131 = vmatpush1.bf16.msra.mxu0 0
    %132 = vmatprep.subr.bf16.mxu0 0
    %133 = vmatpush1.bf16.msra.mxu0 0
    %134 = vmatprep.subr.bf16.mxu0 0
    %135 = vmatpush1.bf16.msra.mxu0 0
    %136 = vmatprep.subr.bf16.mxu0 0
    %137 = vmatpush1.bf16.msra.mxu0 0
    %138 = vmatprep.subr.bf16.mxu0 0
    %139 = vmatpush1.bf16.msra.mxu0 0
    %140 = vmatprep.subr.bf16.mxu0 0
    %141 = vmatpush1.bf16.msra.mxu0 0
    %142 = vmatprep.subr.bf16.mxu0 0
    %143 = vmatpush1.bf16.msra.mxu0 0
    %144 = vmatprep.subr.bf16.mxu0 0
    %145 = vmatpush1.bf16.msra.mxu0 0
    %146 = vmatprep.subr.bf16.mxu0 0
    %147 = vmatpush1.bf16.msra.mxu0 0
    %148 = vmatprep.subr.bf16.mxu0 0
    %149 = vmatpush1.bf16.msra.mxu0 0
    %150 = vmatprep.mubr.bf16.mxu0 0
    %151 = vmatmul.mubr.bf16.gmra.mrb[0].mxu0 %v95
    %v152 = vpop.f32.mrb[0].mxu0
    %v153 = vadd.f32 0.0, %v152
    %v154 = vpop.f32.mrb[0].mxu0
    %v155 = vadd.f32 0.0, %v154
    %v156 = vpop.f32.mrb[0].mxu0
    %v157 = vadd.f32 0.0, %v156
    %v158 = vpop.f32.mrb[0].mxu0
    %v159 = vadd.f32 0.0, %v158
    %160 = vmatprep.mubr.bf16.mxu0 0
    %161 = vmatmul.mubr.bf16.gmra.mrb[0].mxu0 %v98
    %v162 = vpop.f32.mrb[0].mxu0
    %v163 = vadd.f32 0.0, %v162
    %v164 = vpop.f32.mrb[0].mxu0
    %v165 = vadd.f32 0.0, %v164
    %v166 = vpop.f32.mrb[0].mxu0
    %v167 = vadd.f32 0.0, %v166
    %v168 = vpop.f32.mrb[0].mxu0
    %v169 = vadd.f32 0.0, %v168
    %170 = vmatprep.mubr.bf16.mxu0 0
    %171 = vmatmul.mubr.bf16.gmra.mrb[0].mxu0 %v101
    %v172 = vpop.f32.mrb[0].mxu0
    %v173 = vadd.f32 0.0, %v172
    %v174 = vpop.f32.mrb[0].mxu0
    %v175 = vadd.f32 0.0, %v174
    %v176 = vpop.f32.mrb[0].mxu0
    %v177 = vadd.f32 0.0, %v176
    %v178 = vpop.f32.mrb[0].mxu0
    %v179 = vadd.f32 0.0, %v178
    %180 = vmatprep.mubr.bf16.mxu0 0
    %181 = vmatmul.mubr.bf16.gmra.mrb[0].mxu0 %v104
    %v182 = vpop.f32.mrb[0].mxu0
    %v183 = vadd.f32 0.0, %v182
    %v184 = vpop.f32.mrb[0].mxu0
    %v185 = vadd.f32 0.0, %v184
    %v186 = vpop.f32.mrb[0].mxu0
    %v187 = vadd.f32 0.0, %v186
    %v188 = vpop.f32.mrb[0].mxu0
    %v189 = vadd.f32 0.0, %v188
    %190 = vmatprep.mubr.bf16.mxu0 0
    %191 = vmatmul.mubr.bf16.gmra.mrb[0].mxu0 %v107
    %v192 = vpop.f32.mrb[0].mxu0
    %v193 = vadd.f32 0.0, %v192
    %v194 = vpop.f32.mrb[0].mxu0
    %v195 = vadd.f32 0.0, %v194
    %v196 = vpop.f32.mrb[0].mxu0
    %v197 = vadd.f32 0.0, %v196
    %v198 = vpop.f32.mrb[0].mxu0
    %v199 = vadd.f32 0.0, %v198
    %200 = vmatprep.mubr.bf16.mxu0 0
    %201 = vmatmul.mubr.bf16.gmra.mrb[0].mxu0 %v110
    %v202 = vpop.f32.mrb[0].mxu0
    %v203 = vadd.f32 0.0, %v202
    %v204 = vpop.f32.mrb[0].mxu0
    %v205 = vadd.f32 0.0, %v204
    %v206 = vpop.f32.mrb[0].mxu0
    %v207 = vadd.f32 0.0, %v206
    %v208 = vpop.f32.mrb[0].mxu0
    %v209 = vadd.f32 0.0, %v208
    %210 = vmatprep.mubr.bf16.mxu0 0
    %211 = vmatmul.mubr.bf16.gmra.mrb[0].mxu0 %v113
    %v212 = vpop.f32.mrb[0].mxu0
    %v213 = vadd.f32 0.0, %v212
    %v214 = vpop.f32.mrb[0].mxu0
    %v215 = vadd.f32 0.0, %v214
    %v216 = vpop.f32.mrb[0].mxu0
    %v217 = vadd.f32 0.0, %v216
    %v218 = vpop.f32.mrb[0].mxu0
    %v219 = vadd.f32 0.0, %v218
    %220 = vmatprep.mubr.bf16.mxu0 0
    %221 = vmatmul.mubr.bf16.gmra.mrb[0].mxu0 %v116
    %v222 = vpop.f32.mrb[0].mxu0
    %v223 = vadd.f32 0.0, %v222
    %v224 = vpop.f32.mrb[0].mxu0
    %v225 = vadd.f32 0.0, %v224
    %v226 = vpop.f32.mrb[0].mxu0
    %v227 = vadd.f32 0.0, %v226
    %v228 = vpop.f32.mrb[0].mxu0
    %v229 = vadd.f32 0.0, %v228
    %230 = vdwg.mxu0
    %v231 = vpack.c.bf16 %v157, %v153
    %v232 = vpack.c.bf16 %v159, %v155
    %v233 = vpack.c.bf16 %v167, %v163
    %v234 = vpack.c.bf16 %v169, %v165
    %v235 = vpack.c.bf16 %v177, %v173
    %v236 = vpack.c.bf16 %v179, %v175
    %v237 = vpack.c.bf16 %v187, %v183
    %v238 = vpack.c.bf16 %v189, %v185
    %v239 = vpack.c.bf16 %v197, %v193
    %v240 = vpack.c.bf16 %v199, %v195
    %v241 = vpack.c.bf16 %v207, %v203
    %v242 = vpack.c.bf16 %v209, %v205
    %v243 = vpack.c.bf16 %v217, %v213
    %v244 = vpack.c.bf16 %v219, %v215
    %v245 = vpack.c.bf16 %v227, %v223
    %v246 = vpack.c.bf16 %v229, %v225
    %v263 = vunpack.c.l.b16 %v231
    %v264 = vunpack.c.l.b16 %v232
    %v265 = vunpack.c.h.b16 %v231
    %v266 = vunpack.c.h.b16 %v232
    %v267 = vunpack.c.l.b16 %v233
    %v268 = vunpack.c.l.b16 %v234
    %v269 = vunpack.c.h.b16 %v233
    %v270 = vunpack.c.h.b16 %v234
    %v271 = vunpack.c.l.b16 %v235
    %v272 = vunpack.c.l.b16 %v236
    %v273 = vunpack.c.h.b16 %v235
    %v274 = vunpack.c.h.b16 %v236
    %v275 = vunpack.c.l.b16 %v237
    %v276 = vunpack.c.l.b16 %v238
    %v277 = vunpack.c.h.b16 %v237
    %v278 = vunpack.c.h.b16 %v238
    %v279 = vunpack.c.l.b16 %v239
    %v280 = vunpack.c.l.b16 %v240
    %v281 = vunpack.c.h.b16 %v239
    %v282 = vunpack.c.h.b16 %v240
    %v283 = vunpack.c.l.b16 %v241
    %v284 = vunpack.c.l.b16 %v242
    %v285 = vunpack.c.h.b16 %v241
    %v286 = vunpack.c.h.b16 %v242
    %v287 = vunpack.c.l.b16 %v243
    %v288 = vunpack.c.l.b16 %v244
    %v289 = vunpack.c.h.b16 %v243
    %v290 = vunpack.c.h.b16 %v244
    %v291 = vunpack.c.l.b16 %v245
    %v292 = vunpack.c.l.b16 %v246
    %v293 = vunpack.c.h.b16 %v245
    %v294 = vunpack.c.h.b16 %v246
    %v295 = vpack.c.b16 %v264, %v263
    %v296 = vpack.c.b16 %v266, %v265
    %v297 = vpack.c.b16 %v268, %v267
    %v298 = vpack.c.b16 %v270, %v269
    %v299 = vpack.c.b16 %v272, %v271
    %v300 = vpack.c.b16 %v274, %v273
    %v301 = vpack.c.b16 %v276, %v275
    %v302 = vpack.c.b16 %v278, %v277
    %v303 = vpack.c.b16 %v280, %v279
    %v304 = vpack.c.b16 %v282, %v281
    %v305 = vpack.c.b16 %v284, %v283
    %v306 = vpack.c.b16 %v286, %v285
    %v307 = vpack.c.b16 %v288, %v287
    %v308 = vpack.c.b16 %v290, %v289
    %v309 = vpack.c.b16 %v292, %v291
    %v310 = vpack.c.b16 %v294, %v293
    %327 = vst [vmem:[#allocation2] sm:$0xff] %v295
    %328 = vst [vmem:[#allocation2 + $0x8] sm:$0xff] %v296
    %329 = vst [vmem:[#allocation2 + $0x10] sm:$0xff] %v297
    %330 = vst [vmem:[#allocation2 + $0x18] sm:$0xff] %v298
    %331 = vst [vmem:[#allocation2 + $0x20] sm:$0xff] %v299
    %332 = vst [vmem:[#allocation2 + $0x28] sm:$0xff] %v300
    %333 = vst [vmem:[#allocation2 + $0x30] sm:$0xff] %v301
    %334 = vst [vmem:[#allocation2 + $0x38] sm:$0xff] %v302
    %335 = vst [vmem:[#allocation2 + $0x40] sm:$0xff] %v303
    %336 = vst [vmem:[#allocation2 + $0x48] sm:$0xff] %v304
    %337 = vst [vmem:[#allocation2 + $0x50] sm:$0xff] %v305
    %338 = vst [vmem:[#allocation2 + $0x58] sm:$0xff] %v306
    %339 = vst [vmem:[#allocation2 + $0x60] sm:$0xff] %v307
    %340 = vst [vmem:[#allocation2 + $0x68] sm:$0xff] %v308
    %341 = vst [vmem:[#allocation2 + $0x70] sm:$0xff] %v309
    %342 = vst [vmem:[#allocation2 + $0x78] sm:$0xff] %v310
    // Predicated region
    $region10: #{tpu_custom_call.1} parent=1 // pred_check
      _
    $region11: #{tpu_custom_call.1} parent=1 // pred_check_branch
      %344 = sbr.rel (0) target = $region13
    $region12: #{tpu_custom_call.1} parent=1 // pred_region
      %s346 = ssub.s32 2048, 2048
      %347 = vsyncadd [#allocation3], %s346
      %s348 = sshll.u32 [#allocation2], 4
      %s349 = int_to_ptr.vmem [resolvable:$true] %s348
      %354 = dma.vmem_to_hbm [thread:$0]  %s349, 2048, %s2, [#allocation3], 128, 128, 8
    $region13: #{tpu_custom_call.1} parent=1 // pred_fallthru
      _
    // Predicated region
    $region14: #{tpu_custom_call.1} parent=1 // pred_check
      _
    $region15: #{tpu_custom_call.1} parent=1 // pred_check_branch
      %356 = sbr.rel (0) target = $region17
    $region16: #{tpu_custom_call.1} parent=1 // pred_region
      %357 = dma.done [#allocation3], 2048
    $region17: #{tpu_custom_call.1} parent=1 // pred_fallthru
      _
    %358 = vsyncpa [#allocation3], 1

</llo_original>
